<compile_context>
chip_gen: v7x
topology: tpu7x:2x2x1
jax: 0.10.0
libtpu: 0.0.40
codegen_flags: <defaults>
</compile_context>

<pallas_src>
import functools
import numpy as np
import jax
import jax.numpy as jnp
from jax import lax
from jax.experimental import pallas as pl
from jax.experimental.pallas import tpu as pltpu


def _interp_kernel(x_ref, m_ref, o_ref, *, S, V):
    # x_ref: [1, Tf, K, Tp]   m_ref: [S*V, K]   o_ref: [1, S, Tf, V, Tp]
    Tf = x_ref.shape[1]
    m = m_ref[...]                              # resident in VMEM; loaded once per step
    for f in range(Tf):                         # static unroll; Tf capped small (<=8)
        x = x_ref[0, f]                         # [K, Tp]
        if x.dtype != m.dtype:
            x = x.astype(m.dtype)               # in-kernel cast: keeps one f32 HBM read
        # One fused matmul for all shells: [S*V, K] x [K, Tp] -> [S*V, Tp], f32 acc.
        out = lax.dot_general(
            m, x,
            dimension_numbers=(((1,), (0,)), ((), ())),
            preferred_element_type=jnp.float32)
        for s in range(S):                      # static slice-store per shell
            o_ref[0, s, f] = out[s * V:(s + 1) * V].astype(o_ref.dtype)


def _default_vmem_budget_bytes():
    cap = 64 * 1024 * 1024                      # conservative fallback (v7x per-TC VMEM)
    try:
        info = pltpu.get_tpu_info()
        cap = int(getattr(info, "vmem_capacity_bytes", cap) or cap)
    except Exception:
        pass
    # ~60% of physical VMEM for the pipelined working set, capped; leaves headroom for
    # compiler-internal scratch.  (v5e/v6e: 128 MiB -> ~76 MiB cap at 80; v7x: 64 -> ~38.)
    return max(16 * 1024 * 1024, min(int(cap * 0.6), 80 * 1024 * 1024))


def interp_all_shells(x4, m2, S, V, *, out_dtype=None, tile_p=1024, tile_f=8,
                      vmem_budget_bytes=None):
    """Fused interpolation: [B, F, K, P] x [S*V, K] -> [B, S, F, V, P]."""
    B, F, K, P = x4.shape
    SV, K2 = m2.shape
    assert K == K2 and SV == S * V
    out_dtype = x4.dtype if out_dtype is None else jnp.dtype(out_dtype)

    if vmem_budget_bytes is None:
        vmem_budget_bytes = _default_vmem_budget_bytes()

    # Lane tile (last dim): take all of P when small, otherwise a large multiple of 128
    # so output stores are unmasked (lane-dense) and DMA rows stay long.
    if P <= max(tile_p, 128):
        tp = P
    else:
        tp = max(128, (min(tile_p, P) // 128) * 128)

    # Feature tile: cap the static unroll of the kernel body.
    tf = max(1, min(int(tile_f), F))

    # VMEM guard: the Pallas pipeline double-buffers every operand (including the
    # constant-index m2), so count 2x for all of them.  Shrink tf before tp -- keeping
    # the lane tile large is the biggest measured lever for this writeback-bound kernel.
    def _blocks_bytes(tf_, tp_):
        x_blk = tf_ * K * tp_ * x4.dtype.itemsize
        o_blk = S * tf_ * V * tp_ * out_dtype.itemsize
        m_res = SV * K * m2.dtype.itemsize
        return 2 * (x_blk + o_blk) + 2 * m_res

    while _blocks_bytes(tf, tp) > vmem_budget_bytes and tf > 1:
        tf = max(1, tf // 2)
    while _blocks_bytes(tf, tp) > vmem_budget_bytes and tp > 128:
        tp = max(128, ((tp // 2) // 128) * 128)

    nF = pl.cdiv(F, tf)
    nP = pl.cdiv(P, tp)
    # Spatial-tile axis leads (typically the largest extent), so v7x megacore sharding
    # has work to split even when B == 1; all axes are independent ("parallel").
    grid = (nP, B, nF)

    vmem_limit = int(min(vmem_budget_bytes + (8 << 20), 128 << 20))

    kernel = functools.partial(_interp_kernel, S=S, V=V)
    return pl.pallas_call(
        kernel,
        out_shape=jax.ShapeDtypeStruct((B, S, F, V, P), out_dtype),
        grid=grid,
        in_specs=[
            pl.BlockSpec((1, tf, K, tp), lambda p, b, f: (b, f, 0, p)),
            pl.BlockSpec((SV, K), lambda p, b, f: (0, 0)),     # resident, DMA'd once
        ],
        out_specs=pl.BlockSpec((1, S, tf, V, tp), lambda p, b, f: (b, 0, f, 0, p)),
        compiler_params=pltpu.CompilerParams(
            dimension_semantics=("parallel", "parallel", "parallel"),
            vmem_limit_bytes=vmem_limit),
    )(x4, m2)


class Interpolation:
    """JAX/Pallas port of the PyTorch Interpolation module.

    Takes the underlying matrices directly instead of sampling objects:
      shell_S2SH_list : list of per-shell S2SH matrices, shapes [n_i, C_i]
      shell_inverse   : int array of length V' mapping each input vertex to its shell
      grid_SH2S       : grid SH2S matrix, shape [C_grid, V]
      conv_name       : as in the PyTorch module
      compute_dtype   : optional dtype for the matmul (e.g. jnp.bfloat16); the fused
                        matrix is stored in this dtype and x is cast in-kernel.
                        Accumulation is always float32.
      out_dtype       : optional output dtype (e.g. jnp.bfloat16) -- halves the
                        dominant writeback HBM stream when downstream tolerates it.

    Note: the fused zero-scattered matrix relies on 0 * x == 0; if x carries NaN/Inf
    at vertices excluded from a shell, that shell's output picks up NaN where the
    per-shell reference would not (pathological inputs only).
    """

    def __init__(self, shell_S2SH_list, shell_inverse, grid_SH2S, conv_name,
                 compute_dtype=None, out_dtype=None):
        self.S = len(shell_S2SH_list)
        self.shell_inverse = np.asarray(shell_inverse)
        self.conv_name = conv_name
        self.compute_dtype = compute_dtype
        self.out_dtype = out_dtype

        grid_SH2S = np.asarray(grid_SH2S, dtype=np.float32)
        C_grid = grid_SH2S.shape[0]
        Vp = int(self.shell_inverse.shape[0])

        dense_mats = []
        Vs = []
        for S2SH in shell_S2SH_list:
            S2SH = np.asarray(S2SH, dtype=np.float32)
            C = S2SH.shape[1]
            assert C <= C_grid
            if conv_name in ['spatial_sh']:
                M_i = S2SH
            else:
                M_i = S2SH @ grid_SH2S[:C]
            dense_mats.append(M_i)
            Vs.append(M_i.shape[1])

        # The PyTorch module implicitly requires a single output vertex/coefficient
        # count across shells (it allocates y with one self.V); make that explicit.
        assert len(set(Vs)) == 1, (
            f"All shells must share the same output dimension, got {Vs}")
        self.V = Vs[0]
        self.dense_mats = [jnp.asarray(m) for m in dense_mats]   # for reference / debug

        # Static per-shell vertex indices (shell_inverse is static wrt the module).
        self.shell_idx = [np.nonzero(self.shell_inverse == i)[0]
                          for i in range(self.S)]

        # Fused, zero-scattered, PRE-TRANSPOSED matrix, flattened to [S*V, K=V']:
        #   m2[s*V + v, k] = M_s[row(k), v]   if vertex k belongs to shell s, else 0.
        # Zero columns contribute exactly zero, so contracting over the full V' axis
        # reproduces the gathered einsum; the LHS is in canonical [M, K] orientation.
        m_all = np.zeros((self.S, self.V, Vp), dtype=np.float32)   # [S, V, K]
        for i in range(self.S):
            idx = self.shell_idx[i]
            assert len(idx) == dense_mats[i].shape[0], (
                f"shell {i}: {len(idx)} vertices in shell_inverse but matrix has "
                f"{dense_mats[i].shape[0]} rows")
            m_s = np.zeros((self.V, Vp), dtype=np.float32)
            m_s[:, idx] = dense_mats[i].T                          # [V, n_i]
            m_all[i] = m_s
        m2 = m_all.reshape(self.S * self.V, Vp)
        self.m2 = jnp.asarray(m2)
        self.m2_compute = (self.m2.astype(compute_dtype)
                           if compute_dtype is not None else self.m2)

    def __call__(self, x):
        B, F_in, Vp, X, Y, Z = x.shape
        assert Vp == int(self.shell_inverse.shape[0])
        P = X * Y * Z
        x4 = x.reshape(B, F_in, Vp, P)          # no wrapper-side dtype cast (see kernel)
        out_dtype = x.dtype if self.out_dtype is None else self.out_dtype
        y5 = interp_all_shells(x4, self.m2_compute, self.S, self.V,
                               out_dtype=out_dtype)                 # [B, S, F, V, P]
        # Channel order matches PyTorch: y[:, s*F_in + f] == shell s, feature f.
        y = y5.reshape(B, self.S * F_in, self.V, X, Y, Z)
        if self.conv_name in ['spatial_vec', 'spatial_sh']:
            y = y.reshape(B, -1, 1, X, Y, Z)
        return y


def _reference(x, dense_mats, shell_inverse, conv_name):
    """Pure-JAX mirror of the PyTorch forward."""
    B, F_in, _, X, Y, Z = x.shape
    outs = []
    for i in range(len(dense_mats)):
        idx = np.nonzero(np.asarray(shell_inverse) == i)[0]
        x_shell = x[:, :, idx]
        outs.append(jnp.einsum('ijklmn,kp->ijplmn', x_shell, dense_mats[i]))
    y = jnp.concatenate(outs, axis=1)
    if conv_name in ['spatial_vec', 'spatial_sh']:
        y = y.reshape(B, -1, 1, X, Y, Z)
    return y


if __name__ == "__main__":
    # Small, deterministic synthetic setup.  P = X*Y*Z = 128 -> lane-dense stores.
    B, F_in = 2, 3
    X, Y, Z = 4, 4, 8
    S = 2
    n_per_shell = [6, 10]
    Vp = sum(n_per_shell)          # V' = 16 input vertices
    C_grid, V = 9, 16              # grid SH coeffs / grid vertices
    conv_name = 'spatial_vec'

    key = jax.random.PRNGKey(0)
    k_sh2s, k_s0, k_s1, k_x = jax.random.split(key, 4)
    SH2S = jax.random.normal(k_sh2s, (C_grid, V), dtype=jnp.float32)
    S2SH_list = [
        jax.random.normal(k_s0, (n_per_shell[0], 6), dtype=jnp.float32),
        jax.random.normal(k_s1, (n_per_shell[1], 4), dtype=jnp.float32),
    ]
    # Interleaved shell membership: 6 vertices in shell 0, 10 in shell 1.
    shell_inverse = np.array([0, 1, 1, 0, 1, 0, 1, 1, 0, 1, 0, 1, 1, 0, 1, 1],
                             dtype=np.int32)

    x = jax.random.normal(k_x, (B, F_in, Vp, X, Y, Z), dtype=jnp.float32)

    # --- f32 path (module default) ---
    mod = Interpolation(S2SH_list, shell_inverse, SH2S, conv_name)
    y = jax.block_until_ready(mod(x))
    y_ref = jax.block_until_ready(_reference(x, mod.dense_mats, shell_inverse, conv_name))
    assert y.shape == (B, F_in * S * V, 1, X, Y, Z), y.shape
    np.testing.assert_allclose(np.asarray(y), np.asarray(y_ref), rtol=1e-4, atol=1e-3)

    # --- bf16 compute + bf16 output path (halves the dominant writeback stream) ---
    mod_bf16 = Interpolation(S2SH_list, shell_inverse, SH2S, conv_name,
                             compute_dtype=jnp.bfloat16, out_dtype=jnp.bfloat16)
    y_bf = jax.block_until_ready(mod_bf16(x))
    assert y_bf.dtype == jnp.bfloat16
    assert y_bf.shape == (B, F_in * S * V, 1, X, Y, Z), y_bf.shape
    y_bf_f32 = np.asarray(y_bf.astype(jnp.float32))
    scale = float(np.max(np.abs(np.asarray(y_ref))))
    np.testing.assert_allclose(y_bf_f32, np.asarray(y_ref),
                               rtol=5e-2, atol=6e-2 * scale)

    # --- 'spatial_sh' path (shells must share the same SH truncation) ---
    S2SH_sh_list = [
        jax.random.normal(k_s0, (n_per_shell[0], 6), dtype=jnp.float32),
        jax.random.normal(k_s1, (n_per_shell[1], 6), dtype=jnp.float32),
    ]
    mod_sh = Interpolation(S2SH_sh_list, shell_inverse, SH2S, 'spatial_sh')
    y_sh = jax.block_until_ready(mod_sh(x))
    y_sh_ref = jax.block_until_ready(
        _reference(x, mod_sh.dense_mats, shell_inverse, 'spatial_sh'))
    assert y_sh.shape == (B, F_in * S * 6, 1, X, Y, Z), y_sh.shape
    np.testing.assert_allclose(np.asarray(y_sh), np.asarray(y_sh_ref),
                               rtol=1e-4, atol=1e-3)

    print("KERNEL_OK")
</pallas_src>

<mosaic_0001>
module attributes {stable_mosaic.version = 11 : i64} {
  func.func @_interp_kernel(%arg0: i32, %arg1: i32, %arg2: i32, %arg3: memref<1x3x16x128xf32, #tpu.memory_space<vmem>>, %arg4: memref<32x16xf32, #tpu.memory_space<vmem>>, %arg5: memref<1x2x3x16x128xf32, #tpu.memory_space<vmem>>) attributes {dimension_semantics = [#tpu.dimension_semantics<parallel>, #tpu.dimension_semantics<parallel>, #tpu.dimension_semantics<parallel>], iteration_bounds = array<i64: 1, 2, 1>, scalar_prefetch = 0 : i64, scratch_operands = 0 : i64, tpu.core_type = #tpu.core_type<tc>, window_params = [{transform_indices = @transform_0, window_bounds = array<i64: 1, 3, 16, 128>}, {pipeline_mode = #tpu.pipeline_mode<synchronous>, transform_indices = @transform_1, window_bounds = array<i64: 32, 16>}, {transform_indices = @transform_2, window_bounds = array<i64: 1, 2, 3, 16, 128>}]} {
    %c0 = arith.constant 0 : index
    %c0_0 = arith.constant 0 : index
    %0 = vector.load %arg4[%c0, %c0_0] : memref<32x16xf32, #tpu.memory_space<vmem>>, vector<32x16xf32>
    %c0_1 = arith.constant 0 : index
    %c0_2 = arith.constant 0 : index
    %c0_3 = arith.constant 0 : index
    %c0_4 = arith.constant 0 : index
    %1 = vector.load %arg3[%c0_1, %c0_2, %c0_3, %c0_4] : memref<1x3x16x128xf32, #tpu.memory_space<vmem>>, vector<1x1x16x128xf32>
    %2 = vector.shape_cast %1 : vector<1x1x16x128xf32> to vector<16x128xf32>
    %cst = arith.constant dense<0.000000e+00> : vector<32x128xf32>
    %3 = tpu.matmul %0, %2, %cst {dimension_numbers = #tpu.dot_dimension_numbers<[1], [0], [0], [1], [0, 0, 1, 1], [], []>} : vector<32x16xf32>, vector<16x128xf32>, vector<32x128xf32> -> vector<32x128xf32>
    %4 = vector.extract_strided_slice %3 {offsets = [0, 0], sizes = [16, 128], strides = [1, 1]} : vector<32x128xf32> to vector<16x128xf32>
    %c0_5 = arith.constant 0 : index
    %c0_6 = arith.constant 0 : index
    %c0_7 = arith.constant 0 : index
    %c0_8 = arith.constant 0 : index
    %c0_9 = arith.constant 0 : index
    %5 = vector.load %arg5[%c0_5, %c0_6, %c0_7, %c0_8, %c0_9] : memref<1x2x3x16x128xf32, #tpu.memory_space<vmem>>, vector<1x1x1x16x128xf32>
    %6 = vector.shape_cast %5 : vector<1x1x1x16x128xf32> to vector<16x128xf32>
    %7 = vector.shape_cast %4 : vector<16x128xf32> to vector<1x1x1x16x128xf32>
    tpu.vector_store %arg5[%c0_5, %c0_6, %c0_7, %c0_8, %c0_9], %7 {strides = array<i32>} : memref<1x2x3x16x128xf32, #tpu.memory_space<vmem>>, vector<1x1x1x16x128xf32>,
    %8 = vector.extract_strided_slice %3 {offsets = [16, 0], sizes = [16, 128], strides = [1, 1]} : vector<32x128xf32> to vector<16x128xf32>
    %c0_10 = arith.constant 0 : index
    %c1 = arith.constant 1 : index
    %c0_11 = arith.constant 0 : index
    %c0_12 = arith.constant 0 : index
    %c0_13 = arith.constant 0 : index
    %9 = vector.load %arg5[%c0_10, %c1, %c0_11, %c0_12, %c0_13] : memref<1x2x3x16x128xf32, #tpu.memory_space<vmem>>, vector<1x1x1x16x128xf32>
    %10 = vector.shape_cast %9 : vector<1x1x1x16x128xf32> to vector<16x128xf32>
    %11 = vector.shape_cast %8 : vector<16x128xf32> to vector<1x1x1x16x128xf32>
    tpu.vector_store %arg5[%c0_10, %c1, %c0_11, %c0_12, %c0_13], %11 {strides = array<i32>} : memref<1x2x3x16x128xf32, #tpu.memory_space<vmem>>, vector<1x1x1x16x128xf32>,
    %c0_14 = arith.constant 0 : index
    %c1_15 = arith.constant 1 : index
    %c0_16 = arith.constant 0 : index
    %c0_17 = arith.constant 0 : index
    %12 = vector.load %arg3[%c0_14, %c1_15, %c0_16, %c0_17] : memref<1x3x16x128xf32, #tpu.memory_space<vmem>>, vector<1x1x16x128xf32>
    %13 = vector.shape_cast %12 : vector<1x1x16x128xf32> to vector<16x128xf32>
    %cst_18 = arith.constant dense<0.000000e+00> : vector<32x128xf32>
    %14 = tpu.matmul %0, %13, %cst_18 {dimension_numbers = #tpu.dot_dimension_numbers<[1], [0], [0], [1], [0, 0, 1, 1], [], []>} : vector<32x16xf32>, vector<16x128xf32>, vector<32x128xf32> -> vector<32x128xf32>
    %15 = vector.extract_strided_slice %14 {offsets = [0, 0], sizes = [16, 128], strides = [1, 1]} : vector<32x128xf32> to vector<16x128xf32>
    %c0_19 = arith.constant 0 : index
    %c0_20 = arith.constant 0 : index
    %c1_21 = arith.constant 1 : index
    %c0_22 = arith.constant 0 : index
    %c0_23 = arith.constant 0 : index
    %16 = vector.load %arg5[%c0_19, %c0_20, %c1_21, %c0_22, %c0_23] : memref<1x2x3x16x128xf32, #tpu.memory_space<vmem>>, vector<1x1x1x16x128xf32>
    %17 = vector.shape_cast %16 : vector<1x1x1x16x128xf32> to vector<16x128xf32>
    %18 = vector.shape_cast %15 : vector<16x128xf32> to vector<1x1x1x16x128xf32>
    tpu.vector_store %arg5[%c0_19, %c0_20, %c1_21, %c0_22, %c0_23], %18 {strides = array<i32>} : memref<1x2x3x16x128xf32, #tpu.memory_space<vmem>>, vector<1x1x1x16x128xf32>,
    %19 = vector.extract_strided_slice %14 {offsets = [16, 0], sizes = [16, 128], strides = [1, 1]} : vector<32x128xf32> to vector<16x128xf32>
    %c0_24 = arith.constant 0 : index
    %c1_25 = arith.constant 1 : index
    %c1_26 = arith.constant 1 : index
    %c0_27 = arith.constant 0 : index
    %c0_28 = arith.constant 0 : index
    %20 = vector.load %arg5[%c0_24, %c1_25, %c1_26, %c0_27, %c0_28] : memref<1x2x3x16x128xf32, #tpu.memory_space<vmem>>, vector<1x1x1x16x128xf32>
    %21 = vector.shape_cast %20 : vector<1x1x1x16x128xf32> to vector<16x128xf32>
    %22 = vector.shape_cast %19 : vector<16x128xf32> to vector<1x1x1x16x128xf32>
    tpu.vector_store %arg5[%c0_24, %c1_25, %c1_26, %c0_27, %c0_28], %22 {strides = array<i32>} : memref<1x2x3x16x128xf32, #tpu.memory_space<vmem>>, vector<1x1x1x16x128xf32>,
    %c0_29 = arith.constant 0 : index
    %c2 = arith.constant 2 : index
    %c0_30 = arith.constant 0 : index
    %c0_31 = arith.constant 0 : index
    %23 = vector.load %arg3[%c0_29, %c2, %c0_30, %c0_31] : memref<1x3x16x128xf32, #tpu.memory_space<vmem>>, vector<1x1x16x128xf32>
    %24 = vector.shape_cast %23 : vector<1x1x16x128xf32> to vector<16x128xf32>
    %cst_32 = arith.constant dense<0.000000e+00> : vector<32x128xf32>
    %25 = tpu.matmul %0, %24, %cst_32 {dimension_numbers = #tpu.dot_dimension_numbers<[1], [0], [0], [1], [0, 0, 1, 1], [], []>} : vector<32x16xf32>, vector<16x128xf32>, vector<32x128xf32> -> vector<32x128xf32>
    %26 = vector.extract_strided_slice %25 {offsets = [0, 0], sizes = [16, 128], strides = [1, 1]} : vector<32x128xf32> to vector<16x128xf32>
    %c0_33 = arith.constant 0 : index
    %c0_34 = arith.constant 0 : index
    %c2_35 = arith.constant 2 : index
    %c0_36 = arith.constant 0 : index
    %c0_37 = arith.constant 0 : index
    %27 = vector.load %arg5[%c0_33, %c0_34, %c2_35, %c0_36, %c0_37] : memref<1x2x3x16x128xf32, #tpu.memory_space<vmem>>, vector<1x1x1x16x128xf32>
    %28 = vector.shape_cast %27 : vector<1x1x1x16x128xf32> to vector<16x128xf32>
    %29 = vector.shape_cast %26 : vector<16x128xf32> to vector<1x1x1x16x128xf32>
    tpu.vector_store %arg5[%c0_33, %c0_34, %c2_35, %c0_36, %c0_37], %29 {strides = array<i32>} : memref<1x2x3x16x128xf32, #tpu.memory_space<vmem>>, vector<1x1x1x16x128xf32>,
    %30 = vector.extract_strided_slice %25 {offsets = [16, 0], sizes = [16, 128], strides = [1, 1]} : vector<32x128xf32> to vector<16x128xf32>
    %c0_38 = arith.constant 0 : index
    %c1_39 = arith.constant 1 : index
    %c2_40 = arith.constant 2 : index
    %c0_41 = arith.constant 0 : index
    %c0_42 = arith.constant 0 : index
    %31 = vector.load %arg5[%c0_38, %c1_39, %c2_40, %c0_41, %c0_42] : memref<1x2x3x16x128xf32, #tpu.memory_space<vmem>>, vector<1x1x1x16x128xf32>
    %32 = vector.shape_cast %31 : vector<1x1x1x16x128xf32> to vector<16x128xf32>
    %33 = vector.shape_cast %30 : vector<16x128xf32> to vector<1x1x1x16x128xf32>
    tpu.vector_store %arg5[%c0_38, %c1_39, %c2_40, %c0_41, %c0_42], %33 {strides = array<i32>} : memref<1x2x3x16x128xf32, #tpu.memory_space<vmem>>, vector<1x1x1x16x128xf32>,
    return
  }
  func.func @transform_0(%arg0: i32, %arg1: i32, %arg2: i32) -> (i32, i32, i32, i32) {
    %c0_i32 = arith.constant 0 : i32
    %c0_i32_0 = arith.constant 0 : i32
    return %arg1, %arg2, %c0_i32, %arg0 : i32, i32, i32, i32
  }
  func.func @transform_1(%arg0: i32, %arg1: i32, %arg2: i32) -> (i32, i32) {
    %c0_i32 = arith.constant 0 : i32
    %c0_i32_0 = arith.constant 0 : i32
    %c0_i32_1 = arith.constant 0 : i32
    return %c0_i32, %c0_i32_0 : i32, i32
  }
  func.func @transform_2(%arg0: i32, %arg1: i32, %arg2: i32) -> (i32, i32, i32, i32, i32) {
    %c0_i32 = arith.constant 0 : i32
    %c0_i32_0 = arith.constant 0 : i32
    %c0_i32_1 = arith.constant 0 : i32
    return %arg1, %c0_i32, %arg2, %c0_i32_0, %arg0 : i32, i32, i32, i32, i32
  }
}

</mosaic_0001>

<llo_original>
// kernel: tpu_custom_call.1
$region0: #{tpu_custom_call.1}
  #allocation0 [shape = 'u32[]', space=smem, size = 0x4, offset = 0x4, fixed_abs, tag = 'smem constant byte address 0x4 - core index']
  #allocation1 [shape = 'u32[144,128]{1,0:T(1,128)}', space=vmem, size = 0x12000, scoped, tag = 'internal scratch']
  %s0 = inlined_call_operand.hbm [shape: f32[2,3,16,128], index: 0, kind: input, shape index: {}]
  %s1 = inlined_call_operand.vmem [shape: f32[32,16], index: 1, kind: input, shape index: {}]
  %s2 = inlined_call_operand.hbm [shape: f32[2,2,3,16,128], index: 2, kind: output, shape index: {}]
  %s3 = sld [smem:[#allocation0]]
  $region45: #{tpu_custom_call.1} parent=0
    _
  %s5 = ssub.s32 1, %s3
  %s6 = scalar_select 0, %s5, %s3
  $region1: #{tpu_custom_call.1} parent=0
    #allocation2 [shape = 'u8[49152]{0}', space=vmem, size = 0xc000, scoped, tag = 'input window, operand 0']
    #allocation3 [shape = 's32[2]{0}', space=sflag, size = 0x8, scoped, tag = 'scoped memory for tpu_custom_call.1']
    #allocation4 [shape = 's32[2]{0}', space=sflag, size = 0x8, scoped, tag = 'scoped memory for tpu_custom_call.1']
    #allocation5 [shape = 'u8[98304]{0}', space=vmem, size = 0x18000, scoped, tag = 'output window, operand 0']
    %7 = vsyncpa [#allocation3], 0
    %s8 = scalar_lea.sflag [#allocation3], 1
    %9 = vsyncpa %s8, 0
    %10 = vsyncpa [#allocation4], 0
    %s11 = scalar_lea.sflag [#allocation4], 1
    %12 = vsyncpa %s11, 0
    loop: start=0, step=1, limit=4
    $region2: #{tpu_custom_call.1} parent=1 // loop_pre_header
      _
    $region3: #{tpu_custom_call.1} parent=1 // loop_header
      %s14 = sphi 0, %s18
      %p15 = scmp.ge.s32.totalorder %s14, 4
      %s21 = sphi 0, %s40
      %s22 = sphi 0, %s36
      %s23 = sphi 0, %s32
      %s24 = sphi 0, %s21
      %s25 = sphi 0, %s22
      %s26 = sphi 0, %s23
      %s27 = sphi 0, %s24
      %s28 = sphi 0, %s25
      %s29 = sphi 0, %s26
      %s47 = sphi 0, %s49
      %s50 = sphi 0, %s47
      %s51 = sphi 0, %s50
      %s67 = sphi 0, %s51
      %s71 = sphi 0, %s71
      %s73 = sphi 0, %s71
      %s74 = sphi 0, %s73
      %s88 = sphi 0, %s74
      %s98 = sphi 0, %s100
      %s101 = sphi 0, %s98
      %s102 = sphi 0, %s101
      %s118 = sphi 0, %s102
    $region4: #{tpu_custom_call.1} parent=1 // loop_header_branch
      %17 = sbr.rel (%p15) target = $region8
    $region5: #{tpu_custom_call.1} parent=1 // loop_body
      %s19 = ssub.s32 %s14, 1
      %s20 = ssub.s32 %s14, 2
      %s30 = sadd.s32 1, %s23
      %p31 = scmp.ge.s32.totalorder %s30, 1
      %s32 = scalar_select %p31, 0, %s30
      %s33 = sadd.s32 1, %s22
      %s34 = scalar_select %p31, %s33, %s22
      %p35 = scmp.ge.s32.totalorder %s34, 2
      %s36 = scalar_select %p35, 0, %s34
      %s37 = sadd.s32 1, %s21
      %s38 = scalar_select %p35, %s37, %s21
      %p39 = scmp.ge.s32.totalorder %s38, 1
      %s40 = scalar_select %p39, 0, %s38
      %s41 = ssub.s32 %s22, %s36
      %s42 = ssub.s32 %s23, %s32
      %s43 = sor.u32 %s41, %s42
      %s44 = ssub.s32 %s21, %s40
      %s45 = sor.u32 %s43, %s44
      %p46 = scmp.eq.s32.totalorder %s45, 0
      %s48 = sadd.s32 %s47, 1
      %s49 = scalar_select %p46, %s47, %s48
      %p52 = pneg %p46
      %p53 = scmp.eq.s32.totalorder %s14, 1
      %p54 = por %p52, %p53
      %p55 = scmp.ne.s32.totalorder %s47, %s50
      %p56 = scmp.eq.s32.totalorder %s14, 0
      %p57 = por %p55, %p56
      %p58 = scmp.ne.s32.totalorder %s47, %s50
      %p59 = scmp.eq.s32.totalorder %s19, 1
      %p60 = por %p58, %p59
      %p61 = scmp.ne.s32.totalorder %s50, %s51
      %p62 = scmp.eq.s32.totalorder %s19, 0
      %p63 = por %p61, %p62
      %p64 = scmp.ne.s32.totalorder %s50, %s51
      %p65 = scmp.eq.s32.totalorder %s20, 1
      %p66 = por %p64, %p65
      %p68 = scmp.ne.s32.totalorder %s51, %s67
      %p69 = scmp.eq.s32.totalorder %s20, 0
      %p70 = por %p68, %p69
      %s72 = sadd.s32 %s71, 1
      %p75 = scmp.eq.s32.totalorder %s14, 1
      %p76 = scmp.ne.s32.totalorder %s71, %s73
      %p77 = scmp.eq.s32.totalorder %s14, 0
      %p78 = por %p76, %p77
      %p79 = scmp.ne.s32.totalorder %s71, %s73
      %p80 = scmp.eq.s32.totalorder %s19, 1
      %p81 = por %p79, %p80
      %p82 = scmp.ne.s32.totalorder %s73, %s74
      %p83 = scmp.eq.s32.totalorder %s19, 0
      %p84 = por %p82, %p83
      %p85 = scmp.ne.s32.totalorder %s73, %s74
      %p86 = scmp.eq.s32.totalorder %s20, 1
      %p87 = por %p85, %p86
      %p89 = scmp.ne.s32.totalorder %s74, %s88
      %p90 = scmp.eq.s32.totalorder %s20, 0
      %p91 = por %p89, %p90
      %s92 = ssub.s32 %s22, %s36
      %s93 = ssub.s32 %s23, %s32
      %s94 = sor.u32 %s92, %s93
      %s95 = ssub.s32 %s21, %s40
      %s96 = sor.u32 %s94, %s95
      %p97 = scmp.eq.s32.totalorder %s96, 0
      %s99 = sadd.s32 %s98, 1
      %s100 = scalar_select %p97, %s98, %s99
      %p103 = pneg %p97
      %p104 = scmp.eq.s32.totalorder %s14, 1
      %p105 = por %p103, %p104
      %p106 = scmp.ne.s32.totalorder %s98, %s101
      %p107 = scmp.eq.s32.totalorder %s14, 0
      %p108 = por %p106, %p107
      %p109 = scmp.ne.s32.totalorder %s98, %s101
      %p110 = scmp.eq.s32.totalorder %s19, 1
      %p111 = por %p109, %p110
      %p112 = scmp.ne.s32.totalorder %s101, %s102
      %p113 = scmp.eq.s32.totalorder %s19, 0
      %p114 = por %p112, %p113
      %p115 = scmp.ne.s32.totalorder %s101, %s102
      %p116 = scmp.eq.s32.totalorder %s20, 1
      %p117 = por %p115, %p116
      %p119 = scmp.ne.s32.totalorder %s102, %s118
      %p120 = scmp.eq.s32.totalorder %s20, 0
      %p121 = por %p119, %p120
      %p122 = scmp.le.s32.totalorder 1, %s14
      %p123 = scmp.lt.s32.totalorder %s14, 3
      %p124 = pnand %p122, %p123
      %p125 = pneg %p124
      // Predicated region
      $region9: #{tpu_custom_call.1} parent=5 // pred_check
        _
      $region10: #{tpu_custom_call.1} parent=5 // pred_check_branch
        %127 = sbr.rel (%p124) target = $region12
      $region11: #{tpu_custom_call.1} parent=5 // pred_region
        %s128 = ssub.s32 %s14, 1
        // Predicated region
        $region13: #{tpu_custom_call.1} parent=11 // pred_check
          %p129 = pneg %p84
        $region14: #{tpu_custom_call.1} parent=11 // pred_check_branch
          %131 = sbr.rel (%p129) target = $region16
        $region15: #{tpu_custom_call.1} parent=11 // pred_region
          _
        $region16: #{tpu_custom_call.1} parent=11 // pred_fallthru
          _
      $region12: #{tpu_custom_call.1} parent=5 // pred_fallthru
        _
      %p132 = scmp.lt.s32.totalorder %s14, 2
      // Predicated region
      $region17: #{tpu_custom_call.1} parent=5 // pred_check
        %p133 = pneg %p132
      $region18: #{tpu_custom_call.1} parent=5 // pred_check_branch
        %135 = sbr.rel (%p133) target = $region20
      $region19: #{tpu_custom_call.1} parent=5 // pred_region
        // Predicated region
        $region21: #{tpu_custom_call.1} parent=19 // pred_check
          %p136 = pneg %p57
        $region22: #{tpu_custom_call.1} parent=19 // pred_check_branch
          %138 = sbr.rel (%p136) target = $region24
        $region23: #{tpu_custom_call.1} parent=19 // pred_region
          %s139 = sand.u32 %s47, 1
          %s140 = scalar_lea.sflag [#allocation3], %s139
          %s141 = sand.u32 %s47, 1
          %s142 = smul.addr %s141, 48
          %s143 = scalar_lea.vmem [#allocation2], %s142
          %s144 = smul.u32 3, %s23
          %s146 = ssub.s32 768, 768
          %147 = vsyncadd %s140, %s146
          %s148 = smul.addr %s144, 2
          %s149 = sadd.s32 %s21, %s148
          %s150 = smul.addr %s22, 6
          %s151 = sadd.s32 %s149, %s150
          %s152 = smul.addr %s151, 128
          %s153 = scalar_lea.hbm %s0, %s152
          %s154 = sshll.u32 %s143, 4
          %s155 = int_to_ptr.vmem [resolvable:$true] %s154
          %160 = dma.hbm_to_vmem [thread:$0]  %s153, 768, %s155, %s140, 128, 128, 8
        $region24: #{tpu_custom_call.1} parent=19 // pred_fallthru
          _
      $region20: #{tpu_custom_call.1} parent=5 // pred_fallthru
        _
      %p161 = scmp.le.s32.totalorder 1, %s14
      %p162 = scmp.lt.s32.totalorder %s14, 3
      %p163 = pnand %p161, %p162
      %p164 = pneg %p163
      // Predicated region
      $region25: #{tpu_custom_call.1} parent=5 // pred_check
        _
      $region26: #{tpu_custom_call.1} parent=5 // pred_check_branch
        %166 = sbr.rel (%p163) target = $region28
      $region27: #{tpu_custom_call.1} parent=5 // pred_region
        %s167 = ssub.s32 %s14, 1
        %s168 = sand.u32 %s50, 1
        %s169 = scalar_lea.sflag [#allocation3], %s168
        %s170 = sand.u32 %s50, 1
        %s171 = smul.addr %s170, 48
        %s172 = scalar_lea.vmem [#allocation2], %s171
        // Predicated region
        $region29: #{tpu_custom_call.1} parent=27 // pred_check
          %p173 = pneg %p63
        $region30: #{tpu_custom_call.1} parent=27 // pred_check_branch
          %175 = sbr.rel (%p173) target = $region32
        $region31: #{tpu_custom_call.1} parent=27 // pred_region
          %176 = dma.done %s169, 768
        $region32: #{tpu_custom_call.1} parent=27 // pred_fallthru
          _
        %s177 = sand.u32 %s50, 1
        %s178 = scalar_lea.sflag [#allocation3], %s177
        %s179 = sand.u32 %s50, 1
        %s180 = smul.addr %s179, 48
        %s181 = scalar_lea.vmem [#allocation2], %s180
        %p182 = pneg %p63
        %p183 = pneg %p60
        %p184 = pneg %p84
        %p185 = pneg %p81
        %p186 = pneg %p114
        %p187 = pneg %p111
        %s188 = sand.u32 %s101, 1
        %s189 = scalar_lea.sflag [#allocation4], %s188
        %s190 = sand.u32 %s101, 1
        %s191 = smul.addr %s190, 96
        %s192 = scalar_lea.vmem [#allocation5], %s191
        %s193 = smul.u32 3, %s26
        %s194 = smul.u32 3, %s26
        %v195 = vld [vmem:[%s1] sm:$0xff]
        %v196 = vld [vmem:[%s1 + $0x8] sm:$0xff]
        %v197 = vld [vmem:[%s1 + $0x10] sm:$0xff]
        %v198 = vld [vmem:[%s1 + $0x18] sm:$0xff]
        %v199 = vld [vmem:[%s172] sm:$0xff]
        %v200 = vld [vmem:[%s172 + $0x8] sm:$0xff]
        %vm201 = vcmask 130048
        %v203 = vsel %vm201, %v195, 0
        %v206 = vsel %vm201, %v196, 0
        %v209 = vsel %vm201, %v197, 0
        %v212 = vsel %vm201, %v198, 0
        %214 = vmatprep.subr.mxu0 0.0
        %215 = vmatpush1.msra.mxu0 %v199
        %216 = vmatprep.subr.mxu0 0.0
        %217 = vmatpush1.msra.mxu0 %v200
        %218 = vmatprep.subr.mxu0 0.0
        %219 = vmatpush1.msra.mxu0 0.0
        %220 = vmatprep.subr.mxu0 0.0
        %221 = vmatpush1.msra.mxu0 0.0
        %222 = vmatprep.subr.mxu0 0.0
        %223 = vmatpush1.msra.mxu0 0.0
        %224 = vmatprep.subr.mxu0 0.0
        %225 = vmatpush1.msra.mxu0 0.0
        %226 = vmatprep.subr.mxu0 0.0
        %227 = vmatpush1.msra.mxu0 0.0
        %228 = vmatprep.subr.mxu0 0.0
        %229 = vmatpush1.msra.mxu0 0.0
        %230 = vmatprep.subr.mxu0 0.0
        %231 = vmatpush1.msra.mxu0 0.0
        %232 = vmatprep.subr.mxu0 0.0
        %233 = vmatpush1.msra.mxu0 0.0
        %234 = vmatprep.subr.mxu0 0.0
        %235 = vmatpush1.msra.mxu0 0.0
        %236 = vmatprep.subr.mxu0 0.0
        %237 = vmatpush1.msra.mxu0 0.0
        %238 = vmatprep.subr.mxu0 0.0
        %239 = vmatpush1.msra.mxu0 0.0
        %240 = vmatprep.subr.mxu0 0.0
        %241 = vmatpush1.msra.mxu0 0.0
        %242 = vmatprep.subr.mxu0 0.0
        %243 = vmatpush1.msra.mxu0 0.0
        %244 = vmatprep.subr.mxu0 0.0
        %245 = vmatpush1.msra.mxu0 0.0
        %246 = vmatprep.subr.mxu0 0.0
        %247 = vmatpush1.msra.mxu0 0.0
        %248 = vmatprep.subr.mxu0 0.0
        %249 = vmatpush1.msra.mxu0 0.0
        %250 = vmatprep.subr.mxu0 0.0
        %251 = vmatpush1.msra.mxu0 0.0
        %252 = vmatprep.subr.mxu0 0.0
        %253 = vmatpush1.msra.mxu0 0.0
        %254 = vmatprep.subr.mxu0 0.0
        %255 = vmatpush1.msra.mxu0 0.0
        %256 = vmatprep.subr.mxu0 0.0
        %257 = vmatpush1.msra.mxu0 0.0
        %258 = vmatprep.subr.mxu0 0.0
        %259 = vmatpush1.msra.mxu0 0.0
        %260 = vmatprep.subr.mxu0 0.0
        %261 = vmatpush1.msra.mxu0 0.0
        %262 = vmatprep.subr.mxu0 0.0
        %263 = vmatpush1.msra.mxu0 0.0
        %264 = vmatprep.subr.mxu0 0.0
        %265 = vmatpush1.msra.mxu0 0.0
        %266 = vmatprep.subr.mxu0 0.0
        %267 = vmatpush1.msra.mxu0 0.0
        %268 = vmatprep.subr.mxu0 0.0
        %269 = vmatpush1.msra.mxu0 0.0
        %270 = vmatprep.subr.mxu0 0.0
        %271 = vmatpush1.msra.mxu0 0.0
        %272 = vmatprep.subr.mxu0 0.0
        %273 = vmatpush1.msra.mxu0 0.0
        %274 = vmatprep.subr.mxu0 0.0
        %275 = vmatpush1.msra.mxu0 0.0
        %276 = vmatprep.subr.mxu0 0.0
        %277 = vmatpush1.msra.mxu0 0.0
        %278 = vmatprep.mubr.f32.mxu0 0.0
        %279 = vmatmul.mubr.f32.gmra.mrb[0].mxu0 %v203
        %v280 = vpop.f32.mrb[0].mxu0
        %v281 = vadd.f32 0.0, %v280
        %v282 = vpop.f32.mrb[0].mxu0
        %283 = vmatprep.mubr.f32.mxu0 0.0
        %284 = vmatmul.mubr.f32.gmra.mrb[0].mxu0 %v206
        %v285 = vpop.f32.mrb[0].mxu0
        %v286 = vadd.f32 0.0, %v285
        %v287 = vpop.f32.mrb[0].mxu0
        %288 = vmatprep.mubr.f32.mxu0 0.0
        %289 = vmatmul.mubr.f32.gmra.mrb[0].mxu0 %v209
        %v290 = vpop.f32.mrb[0].mxu0
        %v291 = vadd.f32 0.0, %v290
        %v292 = vpop.f32.mrb[0].mxu0
        %293 = vmatprep.mubr.f32.mxu0 0.0
        %294 = vmatmul.mubr.f32.gmra.mrb[0].mxu0 %v212
        %v295 = vpop.f32.mrb[0].mxu0
        %v296 = vadd.f32 0.0, %v295
        %v297 = vpop.f32.mrb[0].mxu0
        %298 = vdwg.mxu0
        %299 = vst [vmem:[%s192] sm:$0xff] %v281
        %300 = vst [vmem:[%s192 + $0x8] sm:$0xff] %v286
        %s301 = scalar_lea.vmem %s192, 48 [#allocation5]
        %302 = vst [vmem:[%s301] sm:$0xff] %v291
        %303 = vst [vmem:[%s301 + $0x8] sm:$0xff] %v296
        %s304 = scalar_lea.vmem %s172, 16 [#allocation2]
        %v305 = vld [vmem:[%s304] sm:$0xff]
        %v306 = vld [vmem:[%s304 + $0x8] sm:$0xff]
        %307 = vmatprep.subr.mxu0 0.0
        %308 = vmatpush1.msra.mxu0 %v305
        %309 = vmatprep.subr.mxu0 0.0
        %310 = vmatpush1.msra.mxu0 %v306
        %311 = vmatprep.subr.mxu0 0.0
        %312 = vmatpush1.msra.mxu0 0.0
        %313 = vmatprep.subr.mxu0 0.0
        %314 = vmatpush1.msra.mxu0 0.0
        %315 = vmatprep.subr.mxu0 0.0
        %316 = vmatpush1.msra.mxu0 0.0
        %317 = vmatprep.subr.mxu0 0.0
        %318 = vmatpush1.msra.mxu0 0.0
        %319 = vmatprep.subr.mxu0 0.0
        %320 = vmatpush1.msra.mxu0 0.0
        %321 = vmatprep.subr.mxu0 0.0
        %322 = vmatpush1.msra.mxu0 0.0
        %323 = vmatprep.subr.mxu0 0.0
        %324 = vmatpush1.msra.mxu0 0.0
        %325 = vmatprep.subr.mxu0 0.0
        %326 = vmatpush1.msra.mxu0 0.0
        %327 = vmatprep.subr.mxu0 0.0
        %328 = vmatpush1.msra.mxu0 0.0
        %329 = vmatprep.subr.mxu0 0.0
        %330 = vmatpush1.msra.mxu0 0.0
        %331 = vmatprep.subr.mxu0 0.0
        %332 = vmatpush1.msra.mxu0 0.0
        %333 = vmatprep.subr.mxu0 0.0
        %334 = vmatpush1.msra.mxu0 0.0
        %335 = vmatprep.subr.mxu0 0.0
        %336 = vmatpush1.msra.mxu0 0.0
        %337 = vmatprep.subr.mxu0 0.0
        %338 = vmatpush1.msra.mxu0 0.0
        %339 = vmatprep.subr.mxu0 0.0
        %340 = vmatpush1.msra.mxu0 0.0
        %341 = vmatprep.subr.mxu0 0.0
        %342 = vmatpush1.msra.mxu0 0.0
        %343 = vmatprep.subr.mxu0 0.0
        %344 = vmatpush1.msra.mxu0 0.0
        %345 = vmatprep.subr.mxu0 0.0
        %346 = vmatpush1.msra.mxu0 0.0
        %347 = vmatprep.subr.mxu0 0.0
        %348 = vmatpush1.msra.mxu0 0.0
        %349 = vmatprep.subr.mxu0 0.0
        %350 = vmatpush1.msra.mxu0 0.0
        %351 = vmatprep.subr.mxu0 0.0
        %352 = vmatpush1.msra.mxu0 0.0
        %353 = vmatprep.subr.mxu0 0.0
        %354 = vmatpush1.msra.mxu0 0.0
        %355 = vmatprep.subr.mxu0 0.0
        %356 = vmatpush1.msra.mxu0 0.0
        %357 = vmatprep.subr.mxu0 0.0
        %358 = vmatpush1.msra.mxu0 0.0
        %359 = vmatprep.subr.mxu0 0.0
        %360 = vmatpush1.msra.mxu0 0.0
        %361 = vmatprep.subr.mxu0 0.0
        %362 = vmatpush1.msra.mxu0 0.0
        %363 = vmatprep.subr.mxu0 0.0
        %364 = vmatpush1.msra.mxu0 0.0
        %365 = vmatprep.subr.mxu0 0.0
        %366 = vmatpush1.msra.mxu0 0.0
        %367 = vmatprep.subr.mxu0 0.0
        %368 = vmatpush1.msra.mxu0 0.0
        %369 = vmatprep.subr.mxu0 0.0
        %370 = vmatpush1.msra.mxu0 0.0
        %371 = vmatprep.mubr.f32.mxu0 0.0
        %372 = vmatmul.mubr.f32.gmra.mrb[0].mxu0 %v203
        %v373 = vpop.f32.mrb[0].mxu0
        %v374 = vadd.f32 0.0, %v373
        %v375 = vpop.f32.mrb[0].mxu0
        %376 = vmatprep.mubr.f32.mxu0 0.0
        %377 = vmatmul.mubr.f32.gmra.mrb[0].mxu0 %v206
        %v378 = vpop.f32.mrb[0].mxu0
        %v379 = vadd.f32 0.0, %v378
        %v380 = vpop.f32.mrb[0].mxu0
        %381 = vmatprep.mubr.f32.mxu0 0.0
        %382 = vmatmul.mubr.f32.gmra.mrb[0].mxu0 %v209
        %v383 = vpop.f32.mrb[0].mxu0
        %v384 = vadd.f32 0.0, %v383
        %v385 = vpop.f32.mrb[0].mxu0
        %386 = vmatprep.mubr.f32.mxu0 0.0
        %387 = vmatmul.mubr.f32.gmra.mrb[0].mxu0 %v212
        %v388 = vpop.f32.mrb[0].mxu0
        %v389 = vadd.f32 0.0, %v388
        %v390 = vpop.f32.mrb[0].mxu0
        %391 = vdwg.mxu0
        %s392 = scalar_lea.vmem %s192, 16 [#allocation5]
        %393 = vst [vmem:[%s392] sm:$0xff] %v374
        %394 = vst [vmem:[%s392 + $0x8] sm:$0xff] %v379
        %s395 = scalar_lea.vmem %s192, 64 [#allocation5]
        %396 = vst [vmem:[%s395] sm:$0xff] %v384
        %397 = vst [vmem:[%s395 + $0x8] sm:$0xff] %v389
        %s398 = scalar_lea.vmem %s172, 32 [#allocation2]
        %v399 = vld [vmem:[%s398] sm:$0xff]
        %v400 = vld [vmem:[%s398 + $0x8] sm:$0xff]
        %401 = vmatprep.subr.mxu0 0.0
        %402 = vmatpush1.msra.mxu0 %v399
        %403 = vmatprep.subr.mxu0 0.0
        %404 = vmatpush1.msra.mxu0 %v400
        %405 = vmatprep.subr.mxu0 0.0
        %406 = vmatpush1.msra.mxu0 0.0
        %407 = vmatprep.subr.mxu0 0.0
        %408 = vmatpush1.msra.mxu0 0.0
        %409 = vmatprep.subr.mxu0 0.0
        %410 = vmatpush1.msra.mxu0 0.0
        %411 = vmatprep.subr.mxu0 0.0
        %412 = vmatpush1.msra.mxu0 0.0
        %413 = vmatprep.subr.mxu0 0.0
        %414 = vmatpush1.msra.mxu0 0.0
        %415 = vmatprep.subr.mxu0 0.0
        %416 = vmatpush1.msra.mxu0 0.0
        %417 = vmatprep.subr.mxu0 0.0
        %418 = vmatpush1.msra.mxu0 0.0
        %419 = vmatprep.subr.mxu0 0.0
        %420 = vmatpush1.msra.mxu0 0.0
        %421 = vmatprep.subr.mxu0 0.0
        %422 = vmatpush1.msra.mxu0 0.0
        %423 = vmatprep.subr.mxu0 0.0
        %424 = vmatpush1.msra.mxu0 0.0
        %425 = vmatprep.subr.mxu0 0.0
        %426 = vmatpush1.msra.mxu0 0.0
        %427 = vmatprep.subr.mxu0 0.0
        %428 = vmatpush1.msra.mxu0 0.0
        %429 = vmatprep.subr.mxu0 0.0
        %430 = vmatpush1.msra.mxu0 0.0
        %431 = vmatprep.subr.mxu0 0.0
        %432 = vmatpush1.msra.mxu0 0.0
        %433 = vmatprep.subr.mxu0 0.0
        %434 = vmatpush1.msra.mxu0 0.0
        %435 = vmatprep.subr.mxu0 0.0
        %436 = vmatpush1.msra.mxu0 0.0
        %437 = vmatprep.subr.mxu0 0.0
        %438 = vmatpush1.msra.mxu0 0.0
        %439 = vmatprep.subr.mxu0 0.0
        %440 = vmatpush1.msra.mxu0 0.0
        %441 = vmatprep.subr.mxu0 0.0
        %442 = vmatpush1.msra.mxu0 0.0
        %443 = vmatprep.subr.mxu0 0.0
        %444 = vmatpush1.msra.mxu0 0.0
        %445 = vmatprep.subr.mxu0 0.0
        %446 = vmatpush1.msra.mxu0 0.0
        %447 = vmatprep.subr.mxu0 0.0
        %448 = vmatpush1.msra.mxu0 0.0
        %449 = vmatprep.subr.mxu0 0.0
        %450 = vmatpush1.msra.mxu0 0.0
        %451 = vmatprep.subr.mxu0 0.0
        %452 = vmatpush1.msra.mxu0 0.0
        %453 = vmatprep.subr.mxu0 0.0
        %454 = vmatpush1.msra.mxu0 0.0
        %455 = vmatprep.subr.mxu0 0.0
        %456 = vmatpush1.msra.mxu0 0.0
        %457 = vmatprep.subr.mxu0 0.0
        %458 = vmatpush1.msra.mxu0 0.0
        %459 = vmatprep.subr.mxu0 0.0
        %460 = vmatpush1.msra.mxu0 0.0
        %461 = vmatprep.subr.mxu0 0.0
        %462 = vmatpush1.msra.mxu0 0.0
        %463 = vmatprep.subr.mxu0 0.0
        %464 = vmatpush1.msra.mxu0 0.0
        %465 = vmatprep.mubr.f32.mxu0 0.0
        %466 = vmatmul.mubr.f32.gmra.mrb[0].mxu0 %v203
        %v467 = vpop.f32.mrb[0].mxu0
        %v468 = vadd.f32 0.0, %v467
        %v469 = vpop.f32.mrb[0].mxu0
        %470 = vmatprep.mubr.f32.mxu0 0.0
        %471 = vmatmul.mubr.f32.gmra.mrb[0].mxu0 %v206
        %v472 = vpop.f32.mrb[0].mxu0
        %v473 = vadd.f32 0.0, %v472
        %v474 = vpop.f32.mrb[0].mxu0
        %475 = vmatprep.mubr.f32.mxu0 0.0
        %476 = vmatmul.mubr.f32.gmra.mrb[0].mxu0 %v209
        %v477 = vpop.f32.mrb[0].mxu0
        %v478 = vadd.f32 0.0, %v477
        %v479 = vpop.f32.mrb[0].mxu0
        %480 = vmatprep.mubr.f32.mxu0 0.0
        %481 = vmatmul.mubr.f32.gmra.mrb[0].mxu0 %v212
        %v482 = vpop.f32.mrb[0].mxu0
        %v483 = vadd.f32 0.0, %v482
        %v484 = vpop.f32.mrb[0].mxu0
        %485 = vdwg.mxu0
        %s486 = scalar_lea.vmem %s192, 32 [#allocation5]
        %487 = vst [vmem:[%s486] sm:$0xff] %v468
        %488 = vst [vmem:[%s486 + $0x8] sm:$0xff] %v473
        %s489 = scalar_lea.vmem %s192, 80 [#allocation5]
        %490 = vst [vmem:[%s489] sm:$0xff] %v478
        %491 = vst [vmem:[%s489 + $0x8] sm:$0xff] %v483
        %s492 = sand.u32 %s101, 1
        %s493 = scalar_lea.sflag [#allocation4], %s492
        %s494 = sand.u32 %s101, 1
        %s495 = smul.addr %s494, 96
        %s496 = scalar_lea.vmem [#allocation5], %s495
        // Predicated region
        $region33: #{tpu_custom_call.1} parent=27 // pred_check
          %p497 = pneg %p111
        $region34: #{tpu_custom_call.1} parent=27 // pred_check_branch
          %499 = sbr.rel (%p497) target = $region36
        $region35: #{tpu_custom_call.1} parent=27 // pred_region
          %s500 = smul.u32 3, %s26
          %s502 = ssub.s32 1536, 1536
          %503 = vsyncadd %s493, %s502
          %s504 = smul.addr %s500, 2
          %s505 = sadd.s32 %s24, %s504
          %s506 = smul.addr %s25, 12
          %s507 = sadd.s32 %s505, %s506
          %s508 = smul.addr %s507, 128
          %s509 = scalar_lea.hbm %s2, %s508
          %s510 = sshll.u32 %s496, 4
          %s511 = int_to_ptr.vmem [resolvable:$true] %s510
          %516 = dma.vmem_to_hbm [thread:$0]  %s511, 1536, %s509, %s493, 128, 128, 8
        $region36: #{tpu_custom_call.1} parent=27 // pred_fallthru
          _
      $region28: #{tpu_custom_call.1} parent=5 // pred_fallthru
        _
      %p517 = scmp.le.s32.totalorder 2, %s14
      // Predicated region
      $region37: #{tpu_custom_call.1} parent=5 // pred_check
        %p518 = pneg %p517
      $region38: #{tpu_custom_call.1} parent=5 // pred_check_branch
        %520 = sbr.rel (%p518) target = $region40
      $region39: #{tpu_custom_call.1} parent=5 // pred_region
        %s521 = ssub.s32 %s14, 2
        // Predicated region
        $region41: #{tpu_custom_call.1} parent=39 // pred_check
          %p522 = pneg %p117
        $region42: #{tpu_custom_call.1} parent=39 // pred_check_branch
          %524 = sbr.rel (%p522) target = $region44
        $region43: #{tpu_custom_call.1} parent=39 // pred_region
          %s525 = sand.u32 %s102, 1
          %s526 = scalar_lea.sflag [#allocation4], %s525
          %s527 = sand.u32 %s102, 1
          %s528 = smul.addr %s527, 96
          %s529 = scalar_lea.vmem [#allocation5], %s528
          %530 = dma.done %s526, 1536
        $region44: #{tpu_custom_call.1} parent=39 // pred_fallthru
          _
      $region40: #{tpu_custom_call.1} parent=5 // pred_fallthru
        _
    $region6: #{tpu_custom_call.1} parent=1 // loop_footer
      %s18 = sadd.s32 1, %s14
    $region7: #{tpu_custom_call.1} parent=1 // loop_footer_branch
      %13 = sbr.rel target = $region3
    $region8: #{tpu_custom_call.1} parent=1 // loop_exit
      _
    %531 = vsyncpa [#allocation3], 1
    %s532 = scalar_lea.sflag [#allocation3], 1
    %533 = vsyncpa %s532, 1
    %534 = vsyncpa [#allocation4], 1
    %s535 = scalar_lea.sflag [#allocation4], 1
    %536 = vsyncpa %s535, 1

</llo_original>
